<compile_context>
chip_gen: v6e
topology: v6e:2x2x1
jax: 0.10.0
libtpu: 0.0.40
codegen_flags: <defaults>
</compile_context>

<pallas_src>
import functools

import jax
import jax.numpy as jnp
from jax.experimental import pallas as pl
from jax.experimental.pallas import tpu as pltpu


def _cdiv(a: int, b: int) -> int:
    return -(-a // b)


def _round_up(x: int, m: int) -> int:
    return _cdiv(x, m) * m


def _backsub_kernel(uc_ref, lc_ref, ub_ref, lb_ref,
                    ub_out_ref, lb_out_ref,
                    acc_ub_ref, acc_lb_ref,
                    *, td: int, tail: int):
    """Grid = (row tiles [parallel], feature tiles [arbitrary, reduced]).

    uc_ref, lc_ref : (TN, TD) constraint coefficient tiles (streamed, native dtype)
    ub_ref, lb_ref : (1, TD) input box bound tiles
    ub_out_ref, lb_out_ref : (TN, 1) outputs, written once at the last k step
    acc_ub_ref, acc_lb_ref : (TN, 128) lane-dense f32 VMEM accumulators
    """
    k = pl.program_id(1)
    last_k = pl.num_programs(1) - 1

    @pl.when(k == 0)
    def _init():
        acc_ub_ref[...] = jnp.zeros_like(acc_ub_ref)
        acc_lb_ref[...] = jnp.zeros_like(acc_lb_ref)

    # Stream the native coefficient dtype; upcast after load, accumulate in f32.
    uc = uc_ref[...].astype(jnp.float32)            # (TN, TD)
    lc = lc_ref[...].astype(jnp.float32)            # (TN, TD)

    # Hoisted broadcasts of the bound vectors — reused by both selects.
    ubv = jnp.broadcast_to(ub_ref[...], uc.shape)   # (TN, TD)
    lbv = jnp.broadcast_to(lb_ref[...], uc.shape)   # (TN, TD)

    # Bit-exact single-select form of the reference:
    #   c > 0 -> c * ub_in ; c <= 0 -> c * lb_in   (bounds swapped for the lower constraint)
    prod_u = uc * jnp.where(uc > 0, ubv, lbv)
    prod_l = lc * jnp.where(lc > 0, lbv, ubv)

    if tail < td:  # static Python branch: only traced when D is not a multiple of 128
        limit = jnp.where(k == last_k, tail, td)
        col = jax.lax.broadcasted_iota(jnp.int32, prod_u.shape, dimension=1)
        keep = col < limit
        prod_u = jnp.where(keep, prod_u, 0.0)
        prod_l = jnp.where(keep, prod_l, 0.0)

    # Lane-dense partial reduction: collapse TD -> 128 with VPU adds over
    # 128-wide, lane-aligned groups; keep (TN, 128) accumulators and defer the
    # 128 -> 1 cross-lane (XLU) reduce to the finalize step.
    ngroups = td // 128
    part_u = prod_u[:, 0:128]
    part_l = prod_l[:, 0:128]
    for g in range(1, ngroups):
        sl = slice(g * 128, (g + 1) * 128)
        part_u = part_u + prod_u[:, sl]
        part_l = part_l + prod_l[:, sl]

    acc_ub_ref[...] += part_u
    acc_lb_ref[...] += part_l

    @pl.when(k == last_k)
    def _finalize():
        ub_out_ref[...] = acc_ub_ref[...].sum(axis=1, keepdims=True)
        lb_out_ref[...] = acc_lb_ref[...].sum(axis=1, keepdims=True)


@functools.partial(jax.jit, static_argnames=("tn", "td"))
def backsubstitute_pallas(uc, lc, uc_bias, lc_bias, lb_flat, ub_flat,
                          tn=None, td=None):
    """Returns (lb, ub), each shape (N,), for the DeepPoly input layer."""
    n, d = uc.shape
    assert lc.shape == (n, d)

    # Bound vectors are tiny: cast/reshape in the wrapper.
    ub_row = ub_flat.astype(jnp.float32).reshape(1, d)
    lb_row = lb_flat.astype(jnp.float32).reshape(1, d)

    TN_CAP, TD_CAP = 512, 2048   # ~8 MiB streamed per step, ~18 MiB double-buffered
    d128 = _round_up(d, 128)

    if td is None:
        if d128 <= TD_CAP:
            td = d128                                    # one feature step
        else:
            td = (TD_CAP // 128) * 128                   # largest 128-multiple <= cap
            while d128 % td:                             # prefer a divisor of ceil128(D)
                td -= 128
    assert td % 128 == 0, "feature tile must be a multiple of 128"

    grid_k = _cdiv(d, td)
    tail = d - (grid_k - 1) * td     # valid columns in the last feature tile (== td if none)

    if tn is None:
        # >= 2 row blocks whenever possible so both v7x TensorCores get work.
        tn = max(8, min(TN_CAP, _round_up(_cdiv(n, 2), 8)))
    assert tn % 8 == 0, "row tile must be a multiple of 8"
    grid_n = _cdiv(n, tn)

    grid = (grid_n, grid_k)
    kernel = functools.partial(_backsub_kernel, td=td, tail=tail)

    itemsize = uc.dtype.itemsize
    cost = pl.CostEstimate(
        flops=4 * n * d,
        transcendentals=0,
        bytes_accessed=2 * n * d * itemsize + 2 * d * 4 + 2 * n * 4)

    ub_acc, lb_acc = pl.pallas_call(
        kernel,
        out_shape=(jax.ShapeDtypeStruct((n, 1), jnp.float32),
                   jax.ShapeDtypeStruct((n, 1), jnp.float32)),
        grid_spec=pltpu.PrefetchScalarGridSpec(
            num_scalar_prefetch=0,
            grid=grid,
            in_specs=[
                pl.BlockSpec((tn, td), lambda i, k: (i, k)),   # uc tile (native dtype)
                pl.BlockSpec((tn, td), lambda i, k: (i, k)),   # lc tile (native dtype)
                pl.BlockSpec((1, td), lambda i, k: (0, k)),    # ub_in tile
                pl.BlockSpec((1, td), lambda i, k: (0, k)),    # lb_in tile
            ],
            out_specs=[
                pl.BlockSpec((tn, 1), lambda i, k: (i, 0)),    # ub (written at last k)
                pl.BlockSpec((tn, 1), lambda i, k: (i, 0)),    # lb (written at last k)
            ],
            scratch_shapes=[
                pltpu.VMEM((tn, 128), jnp.float32),            # lane-dense ub accumulator
                pltpu.VMEM((tn, 128), jnp.float32),            # lane-dense lb accumulator
            ],
        ),
        compiler_params=pltpu.CompilerParams(
            dimension_semantics=("parallel", "arbitrary"),
            vmem_limit_bytes=32 * 1024 * 1024),
        cost_estimate=cost,
    )(uc, lc, ub_row, lb_row)

    # Bias add + final flatten stay in the wrapper (kernel = stream + contract only).
    ub = uc_bias.astype(jnp.float32) + ub_acc[:, 0]
    lb = lc_bias.astype(jnp.float32) + lb_acc[:, 0]
    return lb, ub


class VerifyInput:
    """JAX/Pallas port of the PyTorch VerifyInput module."""

    def __init__(self):
        self.bounds = None  # (lb_flat, ub_flat)

    def forward(self, lb, ub):
        # torch.flatten of the input bounds -> 1D feature vectors (pure glue).
        self.bounds = (lb.reshape(-1), ub.reshape(-1))
        return self.bounds

    def backsubstitute(self, uc, lc, uc_bias, lc_bias, tn=None, td=None):
        lb_flat, ub_flat = self.bounds
        lb_out, ub_out = backsubstitute_pallas(
            uc, lc, uc_bias, lc_bias, lb_flat, ub_flat, tn=tn, td=td)
        return lb_out, ub_out


def _reference(uc, lc, uc_bias, lc_bias, lb_flat, ub_flat):
    ub = (uc_bias
          + (jnp.where(uc > 0, uc, 0.0) * ub_flat).sum(axis=1)
          + (jnp.where(uc < 0, uc, 0.0) * lb_flat).sum(axis=1))
    lb = (lc_bias
          + (jnp.where(lc > 0, lc, 0.0) * lb_flat).sum(axis=1)
          + (jnp.where(lc < 0, lc, 0.0) * ub_flat).sum(axis=1))
    return lb, ub


if __name__ == "__main__":
    key = jax.random.PRNGKey(0)
    k1, k2, k3, k4, k5 = jax.random.split(key, 5)

    # Small NCHW input-bound shapes: batch=1, C=4, H=W=16 -> D=1024 features.
    B, C, H, W = 1, 4, 16, 16
    D = B * C * H * W
    N = 20  # number of constraints (not a multiple of 8 -> exercises partial row blocks)

    x_center = jax.random.normal(k1, (B, C, H, W), dtype=jnp.float32)
    eps = 0.1
    x_lb = x_center - eps
    x_ub = x_center + eps

    uc = jax.random.normal(k2, (N, D), dtype=jnp.float32)
    lc = jax.random.normal(k3, (N, D), dtype=jnp.float32)
    uc_bias = jax.random.normal(k4, (N,), dtype=jnp.float32)
    lc_bias = jax.random.normal(k5, (N,), dtype=jnp.float32)

    mod = VerifyInput()
    lb_flat, ub_flat = mod.forward(x_lb, x_ub)
    lb_ref, ub_ref = _reference(uc, lc, uc_bias, lc_bias, lb_flat, ub_flat)

    # 1) default tiles: D covered in one feature step, N split into two row tiles
    #    (>= 2 'parallel' blocks for v7x megacore) with a partial last block.
    lb_out, ub_out = mod.backsubstitute(uc, lc, uc_bias, lc_bias)
    jax.block_until_ready((lb_out, ub_out))
    assert lb_out.shape == (N,) and ub_out.shape == (N,)
    assert jnp.allclose(lb_out, lb_ref, atol=1e-4, rtol=1e-4)
    assert jnp.allclose(ub_out, ub_ref, atol=1e-4, rtol=1e-4)

    # 2) forced small tiles: multi-step feature reduction + lane-dense scratch
    #    accumulation + multiple partial row blocks.
    lb_out2, ub_out2 = mod.backsubstitute(uc, lc, uc_bias, lc_bias, tn=8, td=128)
    jax.block_until_ready((lb_out2, ub_out2))
    assert jnp.allclose(lb_out2, lb_ref, atol=1e-4, rtol=1e-4)
    assert jnp.allclose(ub_out2, ub_ref, atol=1e-4, rtol=1e-4)

    print("KERNEL_OK")
</pallas_src>

<mosaic_0001>
module attributes {stable_mosaic.version = 11 : i64} {
  func.func @_backsub_kernel(%arg0: i32, %arg1: i32, %arg2: memref<16x1024xf32, #tpu.memory_space<vmem>>, %arg3: memref<16x1024xf32, #tpu.memory_space<vmem>>, %arg4: memref<1x1024xf32, #tpu.memory_space<vmem>>, %arg5: memref<1x1024xf32, #tpu.memory_space<vmem>>, %arg6: memref<16x1xf32, #tpu.memory_space<vmem>>, %arg7: memref<16x1xf32, #tpu.memory_space<vmem>>, %arg8: memref<16x128xf32, #tpu.memory_space<vmem>>, %arg9: memref<16x128xf32, #tpu.memory_space<vmem>>) attributes {dimension_semantics = [#tpu.dimension_semantics<parallel>, #tpu.dimension_semantics<arbitrary>], iteration_bounds = array<i64: 2, 1>, scalar_prefetch = 0 : i64, scratch_operands = 2 : i64, tpu.core_type = #tpu.core_type<tc>, window_params = [{transform_indices = @transform_0, window_bounds = array<i64: 16, 1024>}, {transform_indices = @transform_1, window_bounds = array<i64: 16, 1024>}, {transform_indices = @transform_2, window_bounds = array<i64: 1, 1024>}, {transform_indices = @transform_3, window_bounds = array<i64: 1, 1024>}, {transform_indices = @transform_4, window_bounds = array<i64: 16, 1>}, {transform_indices = @transform_5, window_bounds = array<i64: 16, 1>}]} {
    %c0_i32 = arith.constant 0 : i32
    %0 = arith.cmpi eq, %arg1, %c0_i32 : i32
    %1 = arith.extui %0 : i1 to i32
    %c0_i32_0 = arith.constant 0 : i32
    %2 = arith.cmpi ne, %1, %c0_i32_0 : i32
    scf.if %2 {
      %cst_19 = arith.constant 0.000000e+00 : f32
      %58 = vector.broadcast %cst_19 : f32 to vector<16x128xf32>
      %c0_20 = arith.constant 0 : index
      %c0_21 = arith.constant 0 : index
      %59 = vector.load %arg8[%c0_20, %c0_21] : memref<16x128xf32, #tpu.memory_space<vmem>>, vector<16x128xf32>
      tpu.vector_store %arg8[%c0_20, %c0_21], %58 {strides = array<i32>} : memref<16x128xf32, #tpu.memory_space<vmem>>, vector<16x128xf32>,
      %cst_22 = arith.constant 0.000000e+00 : f32
      %60 = vector.broadcast %cst_22 : f32 to vector<16x128xf32>
      %c0_23 = arith.constant 0 : index
      %c0_24 = arith.constant 0 : index
      %61 = vector.load %arg9[%c0_23, %c0_24] : memref<16x128xf32, #tpu.memory_space<vmem>>, vector<16x128xf32>
      tpu.vector_store %arg9[%c0_23, %c0_24], %60 {strides = array<i32>} : memref<16x128xf32, #tpu.memory_space<vmem>>, vector<16x128xf32>,
    } else {
    }
    %c0 = arith.constant 0 : index
    %c0_1 = arith.constant 0 : index
    %3 = vector.load %arg2[%c0, %c0_1] : memref<16x1024xf32, #tpu.memory_space<vmem>>, vector<16x1024xf32>
    %c0_2 = arith.constant 0 : index
    %c0_3 = arith.constant 0 : index
    %4 = vector.load %arg3[%c0_2, %c0_3] : memref<16x1024xf32, #tpu.memory_space<vmem>>, vector<16x1024xf32>
    %c0_4 = arith.constant 0 : index
    %c0_5 = arith.constant 0 : index
    %5 = vector.load %arg4[%c0_4, %c0_5] : memref<1x1024xf32, #tpu.memory_space<vmem>>, vector<1x1024xf32>
    %6 = vector.shape_cast %5 : vector<1x1024xf32> to vector<1x1024xf32>
    %7 = vector.broadcast %6 : vector<1x1024xf32> to vector<16x1024xf32>
    %c0_6 = arith.constant 0 : index
    %c0_7 = arith.constant 0 : index
    %8 = vector.load %arg5[%c0_6, %c0_7] : memref<1x1024xf32, #tpu.memory_space<vmem>>, vector<1x1024xf32>
    %9 = vector.shape_cast %8 : vector<1x1024xf32> to vector<1x1024xf32>
    %10 = vector.broadcast %9 : vector<1x1024xf32> to vector<16x1024xf32>
    %cst = arith.constant 0.000000e+00 : f32
    %11 = vector.broadcast %cst : f32 to vector<16x1024xf32>
    %12 = arith.cmpf ogt, %3, %11 : vector<16x1024xf32>
    %13 = arith.select %12, %7, %10 : vector<16x1024xi1>, vector<16x1024xf32>
    %14 = arith.mulf %3, %13 : vector<16x1024xf32>
    %cst_8 = arith.constant 0.000000e+00 : f32
    %15 = vector.broadcast %cst_8 : f32 to vector<16x1024xf32>
    %16 = arith.cmpf ogt, %4, %15 : vector<16x1024xf32>
    %17 = arith.select %16, %10, %7 : vector<16x1024xi1>, vector<16x1024xf32>
    %18 = arith.mulf %4, %17 : vector<16x1024xf32>
    %19 = vector.extract_strided_slice %14 {offsets = [0, 0], sizes = [16, 128], strides = [1, 1]} : vector<16x1024xf32> to vector<16x128xf32>
    %20 = vector.extract_strided_slice %18 {offsets = [0, 0], sizes = [16, 128], strides = [1, 1]} : vector<16x1024xf32> to vector<16x128xf32>
    %21 = vector.extract_strided_slice %14 {offsets = [0, 128], sizes = [16, 128], strides = [1, 1]} : vector<16x1024xf32> to vector<16x128xf32>
    %22 = arith.addf %19, %21 : vector<16x128xf32>
    %23 = vector.extract_strided_slice %18 {offsets = [0, 128], sizes = [16, 128], strides = [1, 1]} : vector<16x1024xf32> to vector<16x128xf32>
    %24 = arith.addf %20, %23 : vector<16x128xf32>
    %25 = vector.extract_strided_slice %14 {offsets = [0, 256], sizes = [16, 128], strides = [1, 1]} : vector<16x1024xf32> to vector<16x128xf32>
    %26 = arith.addf %22, %25 : vector<16x128xf32>
    %27 = vector.extract_strided_slice %18 {offsets = [0, 256], sizes = [16, 128], strides = [1, 1]} : vector<16x1024xf32> to vector<16x128xf32>
    %28 = arith.addf %24, %27 : vector<16x128xf32>
    %29 = vector.extract_strided_slice %14 {offsets = [0, 384], sizes = [16, 128], strides = [1, 1]} : vector<16x1024xf32> to vector<16x128xf32>
    %30 = arith.addf %26, %29 : vector<16x128xf32>
    %31 = vector.extract_strided_slice %18 {offsets = [0, 384], sizes = [16, 128], strides = [1, 1]} : vector<16x1024xf32> to vector<16x128xf32>
    %32 = arith.addf %28, %31 : vector<16x128xf32>
    %33 = vector.extract_strided_slice %14 {offsets = [0, 512], sizes = [16, 128], strides = [1, 1]} : vector<16x1024xf32> to vector<16x128xf32>
    %34 = arith.addf %30, %33 : vector<16x128xf32>
    %35 = vector.extract_strided_slice %18 {offsets = [0, 512], sizes = [16, 128], strides = [1, 1]} : vector<16x1024xf32> to vector<16x128xf32>
    %36 = arith.addf %32, %35 : vector<16x128xf32>
    %37 = vector.extract_strided_slice %14 {offsets = [0, 640], sizes = [16, 128], strides = [1, 1]} : vector<16x1024xf32> to vector<16x128xf32>
    %38 = arith.addf %34, %37 : vector<16x128xf32>
    %39 = vector.extract_strided_slice %18 {offsets = [0, 640], sizes = [16, 128], strides = [1, 1]} : vector<16x1024xf32> to vector<16x128xf32>
    %40 = arith.addf %36, %39 : vector<16x128xf32>
    %41 = vector.extract_strided_slice %14 {offsets = [0, 768], sizes = [16, 128], strides = [1, 1]} : vector<16x1024xf32> to vector<16x128xf32>
    %42 = arith.addf %38, %41 : vector<16x128xf32>
    %43 = vector.extract_strided_slice %18 {offsets = [0, 768], sizes = [16, 128], strides = [1, 1]} : vector<16x1024xf32> to vector<16x128xf32>
    %44 = arith.addf %40, %43 : vector<16x128xf32>
    %45 = vector.extract_strided_slice %14 {offsets = [0, 896], sizes = [16, 128], strides = [1, 1]} : vector<16x1024xf32> to vector<16x128xf32>
    %46 = arith.addf %42, %45 : vector<16x128xf32>
    %47 = vector.extract_strided_slice %18 {offsets = [0, 896], sizes = [16, 128], strides = [1, 1]} : vector<16x1024xf32> to vector<16x128xf32>
    %48 = arith.addf %44, %47 : vector<16x128xf32>
    %c0_9 = arith.constant 0 : index
    %c0_10 = arith.constant 0 : index
    %49 = vector.load %arg8[%c0_9, %c0_10] : memref<16x128xf32, #tpu.memory_space<vmem>>, vector<16x128xf32>
    %50 = arith.addf %49, %46 : vector<16x128xf32>
    %c0_11 = arith.constant 0 : index
    %c0_12 = arith.constant 0 : index
    %51 = vector.load %arg8[%c0_11, %c0_12] : memref<16x128xf32, #tpu.memory_space<vmem>>, vector<16x128xf32>
    tpu.vector_store %arg8[%c0_11, %c0_12], %50 {strides = array<i32>} : memref<16x128xf32, #tpu.memory_space<vmem>>, vector<16x128xf32>,
    %c0_13 = arith.constant 0 : index
    %c0_14 = arith.constant 0 : index
    %52 = vector.load %arg9[%c0_13, %c0_14] : memref<16x128xf32, #tpu.memory_space<vmem>>, vector<16x128xf32>
    %53 = arith.addf %52, %48 : vector<16x128xf32>
    %c0_15 = arith.constant 0 : index
    %c0_16 = arith.constant 0 : index
    %54 = vector.load %arg9[%c0_15, %c0_16] : memref<16x128xf32, #tpu.memory_space<vmem>>, vector<16x128xf32>
    tpu.vector_store %arg9[%c0_15, %c0_16], %53 {strides = array<i32>} : memref<16x128xf32, #tpu.memory_space<vmem>>, vector<16x128xf32>,
    %c0_i32_17 = arith.constant 0 : i32
    %55 = arith.cmpi eq, %arg1, %c0_i32_17 : i32
    %56 = arith.extui %55 : i1 to i32
    %c0_i32_18 = arith.constant 0 : i32
    %57 = arith.cmpi ne, %56, %c0_i32_18 : i32
    scf.if %57 {
      %c0_19 = arith.constant 0 : index
      %c0_20 = arith.constant 0 : index
      %58 = vector.load %arg8[%c0_19, %c0_20] : memref<16x128xf32, #tpu.memory_space<vmem>>, vector<16x128xf32>
      %cst_21 = arith.constant dense<0.000000e+00> : vector<16xf32>
      %59 = vector.multi_reduction <add>, %58, %cst_21 [1] : vector<16x128xf32> to vector<16xf32>
      %60 = vector.shape_cast %59 : vector<16xf32> to vector<16x1xf32>
      %c0_22 = arith.constant 0 : index
      %c0_23 = arith.constant 0 : index
      %61 = vector.load %arg6[%c0_22, %c0_23] : memref<16x1xf32, #tpu.memory_space<vmem>>, vector<16x1xf32>
      tpu.vector_store %arg6[%c0_22, %c0_23], %60 {strides = array<i32>} : memref<16x1xf32, #tpu.memory_space<vmem>>, vector<16x1xf32>,
      %c0_24 = arith.constant 0 : index
      %c0_25 = arith.constant 0 : index
      %62 = vector.load %arg9[%c0_24, %c0_25] : memref<16x128xf32, #tpu.memory_space<vmem>>, vector<16x128xf32>
      %cst_26 = arith.constant dense<0.000000e+00> : vector<16xf32>
      %63 = vector.multi_reduction <add>, %62, %cst_26 [1] : vector<16x128xf32> to vector<16xf32>
      %64 = vector.shape_cast %63 : vector<16xf32> to vector<16x1xf32>
      %c0_27 = arith.constant 0 : index
      %c0_28 = arith.constant 0 : index
      %65 = vector.load %arg7[%c0_27, %c0_28] : memref<16x1xf32, #tpu.memory_space<vmem>>, vector<16x1xf32>
      tpu.vector_store %arg7[%c0_27, %c0_28], %64 {strides = array<i32>} : memref<16x1xf32, #tpu.memory_space<vmem>>, vector<16x1xf32>,
    } else {
    }
    return
  }
  func.func @transform_0(%arg0: i32, %arg1: i32) -> (i32, i32) {
    %c0_i32 = arith.constant 0 : i32
    return %arg0, %arg1 : i32, i32
  }
  func.func @transform_1(%arg0: i32, %arg1: i32) -> (i32, i32) {
    %c0_i32 = arith.constant 0 : i32
    return %arg0, %arg1 : i32, i32
  }
  func.func @transform_2(%arg0: i32, %arg1: i32) -> (i32, i32) {
    %c0_i32 = arith.constant 0 : i32
    %c0_i32_0 = arith.constant 0 : i32
    return %c0_i32, %arg1 : i32, i32
  }
  func.func @transform_3(%arg0: i32, %arg1: i32) -> (i32, i32) {
    %c0_i32 = arith.constant 0 : i32
    %c0_i32_0 = arith.constant 0 : i32
    return %c0_i32, %arg1 : i32, i32
  }
  func.func @transform_4(%arg0: i32, %arg1: i32) -> (i32, i32) {
    %c0_i32 = arith.constant 0 : i32
    %c0_i32_0 = arith.constant 0 : i32
    return %arg0, %c0_i32 : i32, i32
  }
  func.func @transform_5(%arg0: i32, %arg1: i32) -> (i32, i32) {
    %c0_i32 = arith.constant 0 : i32
    %c0_i32_0 = arith.constant 0 : i32
    return %arg0, %c0_i32 : i32, i32
  }
}

</mosaic_0001>

<llo_original>
// kernel: backsubstitute_pallas.1
$region0: #{backsubstitute_pallas.1}
  #allocation0 [shape = 'u32[]', space=smem, size = 0x4, offset = 0x4, fixed_abs, tag = 'smem constant byte address 0x4 - core index']
  #allocation1 [shape = 'u32[144,128]{1,0:T(1,128)}', space=vmem, size = 0x12000, scoped, tag = 'internal scratch']
  #allocation2 [shape = 'f32[16,128]{1,0:T(8,128)}', space=vmem, size = 0x2000, scoped, tag = 'scratch operand']
  #allocation3 [shape = 'f32[16,128]{1,0:T(8,128)}', space=vmem, size = 0x2000, scoped, tag = 'scratch operand']
  %s0 = inlined_call_operand.hbm [shape: f32[20,1024], index: 0, kind: input, shape index: {}]
  %s1 = inlined_call_operand.hbm [shape: f32[20,1024], index: 1, kind: input, shape index: {}]
  %s2 = inlined_call_operand.vmem [shape: f32[1,1024], index: 2, kind: input, shape index: {}]
  %s3 = inlined_call_operand.hbm [shape: f32[1,1024], index: 3, kind: input, shape index: {}]
  %s4 = inlined_call_operand.vmem [shape: f32[20,1], index: 4, kind: output, shape index: {0}]
  %s5 = inlined_call_operand.vmem [shape: f32[20,1], index: 5, kind: output, shape index: {1}]
  %6 = xla_tuple %s4, %s5
  %s7 = sld [smem:[#allocation0]]
  $region173: #{backsubstitute_pallas.1} parent=0
    _
  %s9 = ssub.s32 1, %s7
  %s10 = scalar_select 0, %s9, %s7
  $region1: #{backsubstitute_pallas.1} parent=0
    #allocation4 [shape = 'u8[131072]{0}', space=vmem, size = 0x20000, scoped, tag = 'input window, operand 0']
    #allocation5 [shape = 's32[2]{0}', space=sflag, size = 0x8, scoped, tag = 'scoped memory for backsubstitute_pallas.1']
    #allocation6 [shape = 'u8[131072]{0}', space=vmem, size = 0x20000, scoped, tag = 'input window, operand 1']
    #allocation7 [shape = 's32[2]{0}', space=sflag, size = 0x8, scoped, tag = 'scoped memory for backsubstitute_pallas.1']
    #allocation8 [shape = 'u8[4096]{0}', space=vmem, size = 0x1000, scoped, tag = 'input window, operand 3, single buffered']
    #allocation9 [shape = 'u8[16384]{0}', space=vmem, size = 0x4000, scoped, tag = 'output window, operand 0']
    #allocation10 [shape = 'u8[16384]{0}', space=vmem, size = 0x4000, scoped, tag = 'output window, operand 1']
    %11 = vsyncpa [#allocation5], 0
    %s12 = scalar_lea.sflag [#allocation5], 1
    %13 = vsyncpa %s12, 0
    %14 = vsyncpa [#allocation7], 0
    %s15 = scalar_lea.sflag [#allocation7], 1
    %16 = vsyncpa %s15, 0
    loop: start=0, step=1, limit=4
    $region2: #{backsubstitute_pallas.1} parent=1 // loop_pre_header
      _
    $region3: #{backsubstitute_pallas.1} parent=1 // loop_header
      %s18 = sphi 0, %s22
      %p19 = scmp.ge.s32.totalorder %s18, 4
      %s25 = sphi 0, %s37
      %s26 = sphi 0, %s33
      %s27 = sphi 0, %s25
      %s28 = sphi 0, %s26
      %s29 = sphi 0, %s27
      %s30 = sphi 0, %s28
      %s42 = sphi 0, %s44
      %s45 = sphi 0, %s42
      %s46 = sphi 0, %s45
      %s62 = sphi 0, %s46
      %s70 = sphi 0, %s72
      %s73 = sphi 0, %s70
      %s74 = sphi 0, %s73
      %s90 = sphi 0, %s74
      %s96 = sphi 0, %s98
      %s99 = sphi 0, %s96
      %s100 = sphi 0, %s99
      %s116 = sphi 0, %s100
      %s122 = sphi 0, %s124
      %s125 = sphi 0, %s122
      %s126 = sphi 0, %s125
      %s142 = sphi 0, %s126
      %s148 = sphi 0, %s150
      %s151 = sphi 0, %s148
      %s152 = sphi 0, %s151
      %s168 = sphi 0, %s152
      %s174 = sphi 0, %s176
      %s177 = sphi 0, %s174
      %s178 = sphi 0, %s177
      %s194 = sphi 0, %s178
    $region4: #{backsubstitute_pallas.1} parent=1 // loop_header_branch
      %21 = sbr.rel (%p19) target = $region8
    $region5: #{backsubstitute_pallas.1} parent=1 // loop_body
      %s23 = ssub.s32 %s18, 1
      %s24 = ssub.s32 %s18, 2
      %s31 = sadd.s32 1, %s26
      %p32 = scmp.ge.s32.totalorder %s31, 1
      %s33 = scalar_select %p32, 0, %s31
      %s34 = sadd.s32 1, %s25
      %s35 = scalar_select %p32, %s34, %s25
      %p36 = scmp.ge.s32.totalorder %s35, 2
      %s37 = scalar_select %p36, 0, %s35
      %s38 = ssub.s32 %s25, %s37
      %s39 = ssub.s32 %s26, %s33
      %s40 = sor.u32 %s38, %s39
      %p41 = scmp.eq.s32.totalorder %s40, 0
      %s43 = sadd.s32 %s42, 1
      %s44 = scalar_select %p41, %s42, %s43
      %p47 = pneg %p41
      %p48 = scmp.eq.s32.totalorder %s18, 1
      %p49 = por %p47, %p48
      %p50 = scmp.ne.s32.totalorder %s42, %s45
      %p51 = scmp.eq.s32.totalorder %s18, 0
      %p52 = por %p50, %p51
      %p53 = scmp.ne.s32.totalorder %s42, %s45
      %p54 = scmp.eq.s32.totalorder %s23, 1
      %p55 = por %p53, %p54
      %p56 = scmp.ne.s32.totalorder %s45, %s46
      %p57 = scmp.eq.s32.totalorder %s23, 0
      %p58 = por %p56, %p57
      %p59 = scmp.ne.s32.totalorder %s45, %s46
      %p60 = scmp.eq.s32.totalorder %s24, 1
      %p61 = por %p59, %p60
      %p63 = scmp.ne.s32.totalorder %s46, %s62
      %p64 = scmp.eq.s32.totalorder %s24, 0
      %p65 = por %p63, %p64
      %s66 = ssub.s32 %s25, %s37
      %s67 = ssub.s32 %s26, %s33
      %s68 = sor.u32 %s66, %s67
      %p69 = scmp.eq.s32.totalorder %s68, 0
      %s71 = sadd.s32 %s70, 1
      %s72 = scalar_select %p69, %s70, %s71
      %p75 = pneg %p69
      %p76 = scmp.eq.s32.totalorder %s18, 1
      %p77 = por %p75, %p76
      %p78 = scmp.ne.s32.totalorder %s70, %s73
      %p79 = scmp.eq.s32.totalorder %s18, 0
      %p80 = por %p78, %p79
      %p81 = scmp.ne.s32.totalorder %s70, %s73
      %p82 = scmp.eq.s32.totalorder %s23, 1
      %p83 = por %p81, %p82
      %p84 = scmp.ne.s32.totalorder %s73, %s74
      %p85 = scmp.eq.s32.totalorder %s23, 0
      %p86 = por %p84, %p85
      %p87 = scmp.ne.s32.totalorder %s73, %s74
      %p88 = scmp.eq.s32.totalorder %s24, 1
      %p89 = por %p87, %p88
      %p91 = scmp.ne.s32.totalorder %s74, %s90
      %p92 = scmp.eq.s32.totalorder %s24, 0
      %p93 = por %p91, %p92
      %s94 = ssub.s32 %s26, %s33
      %p95 = scmp.eq.s32.totalorder %s94, 0
      %s97 = sadd.s32 %s96, 1
      %s98 = scalar_select %p95, %s96, %s97
      %p101 = pneg %p95
      %p102 = scmp.eq.s32.totalorder %s18, 1
      %p103 = por %p101, %p102
      %p104 = scmp.ne.s32.totalorder %s96, %s99
      %p105 = scmp.eq.s32.totalorder %s18, 0
      %p106 = por %p104, %p105
      %p107 = scmp.ne.s32.totalorder %s96, %s99
      %p108 = scmp.eq.s32.totalorder %s23, 1
      %p109 = por %p107, %p108
      %p110 = scmp.ne.s32.totalorder %s99, %s100
      %p111 = scmp.eq.s32.totalorder %s23, 0
      %p112 = por %p110, %p111
      %p113 = scmp.ne.s32.totalorder %s99, %s100
      %p114 = scmp.eq.s32.totalorder %s24, 1
      %p115 = por %p113, %p114
      %p117 = scmp.ne.s32.totalorder %s100, %s116
      %p118 = scmp.eq.s32.totalorder %s24, 0
      %p119 = por %p117, %p118
      %s120 = ssub.s32 %s26, %s33
      %p121 = scmp.eq.s32.totalorder %s120, 0
      %s123 = sadd.s32 %s122, 1
      %s124 = scalar_select %p121, %s122, %s123
      %p127 = pneg %p121
      %p128 = scmp.eq.s32.totalorder %s18, 1
      %p129 = por %p127, %p128
      %p130 = scmp.ne.s32.totalorder %s122, %s125
      %p131 = scmp.eq.s32.totalorder %s18, 0
      %p132 = por %p130, %p131
      %p133 = scmp.ne.s32.totalorder %s122, %s125
      %p134 = scmp.eq.s32.totalorder %s23, 1
      %p135 = por %p133, %p134
      %p136 = scmp.ne.s32.totalorder %s125, %s126
      %p137 = scmp.eq.s32.totalorder %s23, 0
      %p138 = por %p136, %p137
      %p139 = scmp.ne.s32.totalorder %s125, %s126
      %p140 = scmp.eq.s32.totalorder %s24, 1
      %p141 = por %p139, %p140
      %p143 = scmp.ne.s32.totalorder %s126, %s142
      %p144 = scmp.eq.s32.totalorder %s24, 0
      %p145 = por %p143, %p144
      %s146 = ssub.s32 %s25, %s37
      %p147 = scmp.eq.s32.totalorder %s146, 0
      %s149 = sadd.s32 %s148, 1
      %s150 = scalar_select %p147, %s148, %s149
      %p153 = pneg %p147
      %p154 = scmp.eq.s32.totalorder %s18, 1
      %p155 = por %p153, %p154
      %p156 = scmp.ne.s32.totalorder %s148, %s151
      %p157 = scmp.eq.s32.totalorder %s18, 0
      %p158 = por %p156, %p157
      %p159 = scmp.ne.s32.totalorder %s148, %s151
      %p160 = scmp.eq.s32.totalorder %s23, 1
      %p161 = por %p159, %p160
      %p162 = scmp.ne.s32.totalorder %s151, %s152
      %p163 = scmp.eq.s32.totalorder %s23, 0
      %p164 = por %p162, %p163
      %p165 = scmp.ne.s32.totalorder %s151, %s152
      %p166 = scmp.eq.s32.totalorder %s24, 1
      %p167 = por %p165, %p166
      %p169 = scmp.ne.s32.totalorder %s152, %s168
      %p170 = scmp.eq.s32.totalorder %s24, 0
      %p171 = por %p169, %p170
      %s172 = ssub.s32 %s25, %s37
      %p173 = scmp.eq.s32.totalorder %s172, 0
      %s175 = sadd.s32 %s174, 1
      %s176 = scalar_select %p173, %s174, %s175
      %p179 = pneg %p173
      %p180 = scmp.eq.s32.totalorder %s18, 1
      %p181 = por %p179, %p180
      %p182 = scmp.ne.s32.totalorder %s174, %s177
      %p183 = scmp.eq.s32.totalorder %s18, 0
      %p184 = por %p182, %p183
      %p185 = scmp.ne.s32.totalorder %s174, %s177
      %p186 = scmp.eq.s32.totalorder %s23, 1
      %p187 = por %p185, %p186
      %p188 = scmp.ne.s32.totalorder %s177, %s178
      %p189 = scmp.eq.s32.totalorder %s23, 0
      %p190 = por %p188, %p189
      %p191 = scmp.ne.s32.totalorder %s177, %s178
      %p192 = scmp.eq.s32.totalorder %s24, 1
      %p193 = por %p191, %p192
      %p195 = scmp.ne.s32.totalorder %s178, %s194
      %p196 = scmp.eq.s32.totalorder %s24, 0
      %p197 = por %p195, %p196
      %p198 = scmp.le.s32.totalorder 1, %s18
      %p199 = scmp.lt.s32.totalorder %s18, 3
      %p200 = pnand %p198, %p199
      %p201 = pneg %p200
      // Predicated region
      $region9: #{backsubstitute_pallas.1} parent=5 // pred_check
        _
      $region10: #{backsubstitute_pallas.1} parent=5 // pred_check_branch
        %203 = sbr.rel (%p200) target = $region12
      $region11: #{backsubstitute_pallas.1} parent=5 // pred_region
        %s204 = ssub.s32 %s18, 1
        // Predicated region
        $region13: #{backsubstitute_pallas.1} parent=11 // pred_check
          %p205 = pneg %p112
        $region14: #{backsubstitute_pallas.1} parent=11 // pred_check_branch
          %207 = sbr.rel (%p205) target = $region16
        $region15: #{backsubstitute_pallas.1} parent=11 // pred_region
          %s208 = smul.u32 8, %s28
          %p209 = scmp.lt.s32.totalorder %s208, 7
          %s210 = scalar_select %p209, %s208, 7
          %s211 = scalar_lea.vmem %s2, %s210
          %s212 = smul.u32 8, %s28
        $region16: #{backsubstitute_pallas.1} parent=11 // pred_fallthru
          _
        // Predicated region
        $region17: #{backsubstitute_pallas.1} parent=11 // pred_check
          %p213 = pneg %p138
        $region18: #{backsubstitute_pallas.1} parent=11 // pred_check_branch
          %215 = sbr.rel (%p213) target = $region20
        $region19: #{backsubstitute_pallas.1} parent=11 // pred_region
          %s216 = smul.u32 8, %s28
          %s218 = ssub.s32 128, 128
          %219 = vsyncadd [#allocation7], %s218
          %s220 = smul.addr %s216, 16
          %s221 = scalar_lea.hbm %s3, %s220
          %s223 = sshll.u32 [#allocation8], 4
          %s224 = int_to_ptr.vmem [resolvable:$true] %s223
          %226 = dma.hbm_to_vmem [thread:$0]  %s221, 128, %s224, [#allocation7]
        $region20: #{backsubstitute_pallas.1} parent=11 // pred_fallthru
          _
      $region12: #{backsubstitute_pallas.1} parent=5 // pred_fallthru
        _
      %p227 = scmp.lt.s32.totalorder %s18, 2
      // Predicated region
      $region21: #{backsubstitute_pallas.1} parent=5 // pred_check
        %p228 = pneg %p227
      $region22: #{backsubstitute_pallas.1} parent=5 // pred_check_branch
        %230 = sbr.rel (%p228) target = $region24
      $region23: #{backsubstitute_pallas.1} parent=5 // pred_region
        // Predicated region
        $region25: #{backsubstitute_pallas.1} parent=23 // pred_check
          %p231 = pneg %p52
        $region26: #{backsubstitute_pallas.1} parent=23 // pred_check_branch
          %233 = sbr.rel (%p231) target = $region28
        $region27: #{backsubstitute_pallas.1} parent=23 // pred_region
          %s234 = sand.u32 %s42, 1
          %s235 = scalar_lea.sflag [#allocation5], %s234
          %s236 = sand.u32 %s42, 1
          %s237 = smul.addr %s236, 128
          %s238 = scalar_lea.vmem [#allocation4], %s237
          %s239 = smul.u32 2, %s25
          %s240 = smul.u32 8, %s26
          %s241 = ssub.s32 3, %s239
          %p242 = scmp.lt.s32.totalorder %s241, 2
          %s243 = scalar_select %p242, %s241, 2
          %s244 = smul.u32 128, %s243
          %s245 = smul.u32 %s244, 8
          %s247 = ssub.s32 2048, %s245
          %248 = vsyncadd %s235, %s247
          %p249 = scmp.ne.s32.totalorder 0, %s245
          %s250 = smul.addr %s239, 8
          %s251 = sadd.s32 %s240, %s250
          %s252 = smul.addr %s251, 128
          %s253 = scalar_lea.hbm %s0, %s252
          %s254 = smul.u32 64, %s243
          %s255 = sshll.u32 %s238, 4
          %s256 = int_to_ptr.vmem [resolvable:$true] %s255
          %s257 = sshll.u32 %s254, 4
          %261 = dma.hbm_to_vmem [thread:$0]  (%p249), %s253, %s257, %s256, %s235, 1024, 1024, 64
        $region28: #{backsubstitute_pallas.1} parent=23 // pred_fallthru
          _
        // Predicated region
        $region29: #{backsubstitute_pallas.1} parent=23 // pred_check
          %p262 = pneg %p80
        $region30: #{backsubstitute_pallas.1} parent=23 // pred_check_branch
          %264 = sbr.rel (%p262) target = $region32
        $region31: #{backsubstitute_pallas.1} parent=23 // pred_region
          %s265 = sand.u32 %s18, 1
          %s266 = scalar_lea.sflag [#allocation7], %s265
          %s267 = sand.u32 %s70, 1
          %s268 = smul.addr %s267, 128
          %s269 = scalar_lea.vmem [#allocation6], %s268
          %s270 = smul.u32 2, %s25
          %s271 = smul.u32 8, %s26
          %s272 = ssub.s32 3, %s270
          %p273 = scmp.lt.s32.totalorder %s272, 2
          %s274 = scalar_select %p273, %s272, 2
          %s275 = smul.u32 128, %s274
          %s276 = smul.u32 %s275, 8
          %s278 = ssub.s32 2048, %s276
          %279 = vsyncadd %s266, %s278
          %p280 = scmp.ne.s32.totalorder 0, %s276
          %s281 = smul.addr %s270, 8
          %s282 = sadd.s32 %s271, %s281
          %s283 = smul.addr %s282, 128
          %s284 = scalar_lea.hbm %s1, %s283
          %s285 = smul.u32 64, %s274
          %s286 = sshll.u32 %s269, 4
          %s287 = int_to_ptr.vmem [resolvable:$true] %s286
          %s288 = sshll.u32 %s285, 4
          %292 = dma.hbm_to_vmem [thread:$0]  (%p280), %s284, %s288, %s287, %s266, 1024, 1024, 64
        $region32: #{backsubstitute_pallas.1} parent=23 // pred_fallthru
          _
      $region24: #{backsubstitute_pallas.1} parent=5 // pred_fallthru
        _
      %p293 = scmp.le.s32.totalorder 1, %s18
      %p294 = scmp.lt.s32.totalorder %s18, 3
      %p295 = pnand %p293, %p294
      %p296 = pneg %p295
      // Predicated region
      $region33: #{backsubstitute_pallas.1} parent=5 // pred_check
        _
      $region34: #{backsubstitute_pallas.1} parent=5 // pred_check_branch
        %298 = sbr.rel (%p295) target = $region36
      $region35: #{backsubstitute_pallas.1} parent=5 // pred_region
        %s299 = ssub.s32 %s18, 1
        %s300 = sand.u32 %s45, 1
        %s301 = scalar_lea.sflag [#allocation5], %s300
        %s302 = sand.u32 %s45, 1
        %s303 = smul.addr %s302, 128
        %s304 = scalar_lea.vmem [#allocation4], %s303
        // Predicated region
        $region37: #{backsubstitute_pallas.1} parent=35 // pred_check
          %p305 = pneg %p58
        $region38: #{backsubstitute_pallas.1} parent=35 // pred_check_branch
          %307 = sbr.rel (%p305) target = $region40
        $region39: #{backsubstitute_pallas.1} parent=35 // pred_region
          %308 = dma.done %s301, 2048
        $region40: #{backsubstitute_pallas.1} parent=35 // pred_fallthru
          _
        %s309 = sand.u32 %s23, 1
        %s310 = scalar_lea.sflag [#allocation7], %s309
        %s311 = sand.u32 %s73, 1
        %s312 = smul.addr %s311, 128
        %s313 = scalar_lea.vmem [#allocation6], %s312
        // Predicated region
        $region41: #{backsubstitute_pallas.1} parent=35 // pred_check
          %p314 = pneg %p86
        $region42: #{backsubstitute_pallas.1} parent=35 // pred_check_branch
          %316 = sbr.rel (%p314) target = $region44
        $region43: #{backsubstitute_pallas.1} parent=35 // pred_region
          %317 = dma.done %s310, 2048
        $region44: #{backsubstitute_pallas.1} parent=35 // pred_fallthru
          _
        // Predicated region
        $region45: #{backsubstitute_pallas.1} parent=35 // pred_check
          %p318 = pneg %p138
        $region46: #{backsubstitute_pallas.1} parent=35 // pred_check_branch
          %320 = sbr.rel (%p318) target = $region48
        $region47: #{backsubstitute_pallas.1} parent=35 // pred_region
          %321 = dma.done [#allocation7], 128
        $region48: #{backsubstitute_pallas.1} parent=35 // pred_fallthru
          _
        %s322 = sand.u32 %s45, 1
        %s323 = scalar_lea.sflag [#allocation5], %s322
        %s324 = sand.u32 %s45, 1
        %s325 = smul.addr %s324, 128
        %s326 = scalar_lea.vmem [#allocation4], %s325
        %p327 = pneg %p58
        %p328 = pneg %p55
        %s329 = sand.u32 %s23, 1
        %s330 = scalar_lea.sflag [#allocation7], %s329
        %s331 = sand.u32 %s73, 1
        %s332 = smul.addr %s331, 128
        %s333 = scalar_lea.vmem [#allocation6], %s332
        %p334 = pneg %p86
        %p335 = pneg %p83
        %s336 = smul.u32 8, %s28
        %p337 = scmp.lt.s32.totalorder %s336, 7
        %s338 = scalar_select %p337, %s336, 7
        %s339 = scalar_lea.vmem %s2, %s338
        %p340 = pneg %p112
        %p341 = pneg %p109
        %p342 = pneg %p138
        %p343 = pneg %p135
        %p344 = pneg %p164
        %p345 = pneg %p161
        %s346 = sand.u32 %s151, 1
        %s347 = sand.u32 %s151, 1
        %s348 = smul.addr %s347, 16
        %s349 = scalar_lea.vmem [#allocation9], %s348
        %p350 = pneg %p190
        %p351 = pneg %p187
        %s352 = sand.u32 %s177, 1
        %s353 = sand.u32 %s177, 1
        %s354 = smul.addr %s353, 16
        %s355 = scalar_lea.vmem [#allocation10], %s354
        %s356 = smul.u32 2, %s27
        %s357 = smul.u32 8, %s28
        %s358 = ssub.s32 3, %s356
        %p359 = scmp.lt.s32.totalorder %s358, 2
        %s360 = scalar_select %p359, %s358, 2
        %s361 = smul.u32 128, %s360
        %s362 = smul.u32 %s361, 8
        %s363 = smul.u32 2, %s27
        %s364 = smul.u32 8, %s28
        %s365 = ssub.s32 3, %s363
        %p366 = scmp.lt.s32.totalorder %s365, 2
        %s367 = scalar_select %p366, %s365, 2
        %s368 = smul.u32 128, %s367
        %s369 = smul.u32 %s368, 8
        %s370 = smul.u32 8, %s28
        %p371 = scmp.lt.s32.totalorder %s370, 7
        %s372 = scalar_select %p371, %s370, 7
        %s373 = scalar_lea.vmem %s2, %s372
        %s374 = smul.u32 8, %s28
        %s375 = smul.u32 8, %s28
        %s376 = smul.u32 2, %s27
        %s377 = ssub.s32 3, %s376
        %p378 = scmp.lt.s32.totalorder %s377, 2
        %s379 = scalar_select %p378, %s377, 2
        %s380 = smul.u32 128, %s379
        %s381 = smul.u32 2, %s27
        %s382 = ssub.s32 3, %s381
        %p383 = scmp.lt.s32.totalorder %s382, 2
        %s384 = scalar_select %p383, %s382, 2
        %s385 = smul.u32 128, %s384
        %p386 = scmp.eq.s32.totalorder %s28, 0
        // Predicated region
        $region49: #{backsubstitute_pallas.1} parent=35 // pred_check
          %p387 = pneg %p386
        $region50: #{backsubstitute_pallas.1} parent=35 // pred_check_branch
          %389 = sbr.rel (%p387) target = $region52
        $region51: #{backsubstitute_pallas.1} parent=35 // pred_region
          %390 = vst [vmem:[#allocation2] sm:$0xff] 0.0
          %391 = vst [vmem:[#allocation2 + $0x8] sm:$0xff] 0.0
          %392 = vst [vmem:[#allocation3] sm:$0xff] 0.0
          %393 = vst [vmem:[#allocation3 + $0x8] sm:$0xff] 0.0
        $region52: #{backsubstitute_pallas.1} parent=35 // pred_fallthru
          _
        %v394 = vld [vmem:[%s304] sm:$0xff]
        %v395 = vld [vmem:[%s304 + $0x8] sm:$0xff]
        %v396 = vld [vmem:[%s304 + $0x10] sm:$0xff]
        %v397 = vld [vmem:[%s304 + $0x18] sm:$0xff]
        %v398 = vld [vmem:[%s304 + $0x20] sm:$0xff]
        %v399 = vld [vmem:[%s304 + $0x28] sm:$0xff]
        %v400 = vld [vmem:[%s304 + $0x30] sm:$0xff]
        %v401 = vld [vmem:[%s304 + $0x38] sm:$0xff]
        %v402 = vld [vmem:[%s304 + $0x40] sm:$0xff]
        %v403 = vld [vmem:[%s304 + $0x48] sm:$0xff]
        %v404 = vld [vmem:[%s304 + $0x50] sm:$0xff]
        %v405 = vld [vmem:[%s304 + $0x58] sm:$0xff]
        %v406 = vld [vmem:[%s304 + $0x60] sm:$0xff]
        %v407 = vld [vmem:[%s304 + $0x68] sm:$0xff]
        %v408 = vld [vmem:[%s304 + $0x70] sm:$0xff]
        %v409 = vld [vmem:[%s304 + $0x78] sm:$0xff]
        %v410 = vld [vmem:[%s313] sm:$0xff]
        %v411 = vld [vmem:[%s313 + $0x8] sm:$0xff]
        %v412 = vld [vmem:[%s313 + $0x10] sm:$0xff]
        %v413 = vld [vmem:[%s313 + $0x18] sm:$0xff]
        %v414 = vld [vmem:[%s313 + $0x20] sm:$0xff]
        %v415 = vld [vmem:[%s313 + $0x28] sm:$0xff]
        %v416 = vld [vmem:[%s313 + $0x30] sm:$0xff]
        %v417 = vld [vmem:[%s313 + $0x38] sm:$0xff]
        %v418 = vld [vmem:[%s313 + $0x40] sm:$0xff]
        %v419 = vld [vmem:[%s313 + $0x48] sm:$0xff]
        %v420 = vld [vmem:[%s313 + $0x50] sm:$0xff]
        %v421 = vld [vmem:[%s313 + $0x58] sm:$0xff]
        %v422 = vld [vmem:[%s313 + $0x60] sm:$0xff]
        %v423 = vld [vmem:[%s313 + $0x68] sm:$0xff]
        %v424 = vld [vmem:[%s313 + $0x70] sm:$0xff]
        %v425 = vld [vmem:[%s313 + $0x78] sm:$0xff]
        %v426 = vld [vmem:[%s373] sm:$0xff]
        %v428 = vlaneseq
        %v429 = vshrl.u32 %v428, 7
        %v430 = vsub.s32 0, %v429
        %v431 = vrot.slane %v426, %v430
        %v432 = vlaneseq
        %v433 = vshrl.u32 %v432, 7
        %v434 = vsub.s32 1, %v433
        %v435 = vrot.slane %v426, %v434
        %v436 = vlaneseq
        %v437 = vshrl.u32 %v436, 7
        %v438 = vsub.s32 2, %v437
        %v439 = vrot.slane %v426, %v438
        %v440 = vlaneseq
        %v441 = vshrl.u32 %v440, 7
        %v442 = vsub.s32 3, %v441
        %v443 = vrot.slane %v426, %v442
        %v444 = vlaneseq
        %v445 = vshrl.u32 %v444, 7
        %v446 = vsub.s32 4, %v445
        %v447 = vrot.slane %v426, %v446
        %v448 = vlaneseq
        %v449 = vshrl.u32 %v448, 7
        %v450 = vsub.s32 5, %v449
        %v451 = vrot.slane %v426, %v450
        %v452 = vlaneseq
        %v453 = vshrl.u32 %v452, 7
        %v454 = vsub.s32 6, %v453
        %v455 = vrot.slane %v426, %v454
        %v456 = vlaneseq
        %v457 = vshrl.u32 %v456, 7
        %v458 = vsub.s32 7, %v457
        %v459 = vrot.slane %v426, %v458
        %v468 = vld [vmem:[#allocation8] sm:$0xff]
        %v470 = vlaneseq
        %v471 = vshrl.u32 %v470, 7
        %v472 = vsub.s32 0, %v471
        %v473 = vrot.slane %v468, %v472
        %v474 = vlaneseq
        %v475 = vshrl.u32 %v474, 7
        %v476 = vsub.s32 1, %v475
        %v477 = vrot.slane %v468, %v476
        %v478 = vlaneseq
        %v479 = vshrl.u32 %v478, 7
        %v480 = vsub.s32 2, %v479
        %v481 = vrot.slane %v468, %v480
        %v482 = vlaneseq
        %v483 = vshrl.u32 %v482, 7
        %v484 = vsub.s32 3, %v483
        %v485 = vrot.slane %v468, %v484
        %v486 = vlaneseq
        %v487 = vshrl.u32 %v486, 7
        %v488 = vsub.s32 4, %v487
        %v489 = vrot.slane %v468, %v488
        %v490 = vlaneseq
        %v491 = vshrl.u32 %v490, 7
        %v492 = vsub.s32 5, %v491
        %v493 = vrot.slane %v468, %v492
        %v494 = vlaneseq
        %v495 = vshrl.u32 %v494, 7
        %v496 = vsub.s32 6, %v495
        %v497 = vrot.slane %v468, %v496
        %v498 = vlaneseq
        %v499 = vshrl.u32 %v498, 7
        %v500 = vsub.s32 7, %v499
        %v501 = vrot.slane %v468, %v500
        %vm510 = vcmp.gt.f32.partialorder %v394, 0.0
        %vm511 = vcmp.gt.f32.partialorder %v395, 0.0
        %vm512 = vcmp.gt.f32.partialorder %v396, 0.0
        %vm513 = vcmp.gt.f32.partialorder %v397, 0.0
        %vm514 = vcmp.gt.f32.partialorder %v398, 0.0
        %vm515 = vcmp.gt.f32.partialorder %v399, 0.0
        %vm516 = vcmp.gt.f32.partialorder %v400, 0.0
        %vm517 = vcmp.gt.f32.partialorder %v401, 0.0
        %vm518 = vcmp.gt.f32.partialorder %v402, 0.0
        %vm519 = vcmp.gt.f32.partialorder %v403, 0.0
        %vm520 = vcmp.gt.f32.partialorder %v404, 0.0
        %vm521 = vcmp.gt.f32.partialorder %v405, 0.0
        %vm522 = vcmp.gt.f32.partialorder %v406, 0.0
        %vm523 = vcmp.gt.f32.partialorder %v407, 0.0
        %vm524 = vcmp.gt.f32.partialorder %v408, 0.0
        %vm525 = vcmp.gt.f32.partialorder %v409, 0.0
        %v526 = vsel %vm510, %v431, %v473
        %v527 = vsel %vm511, %v435, %v477
        %v528 = vsel %vm512, %v439, %v481
        %v529 = vsel %vm513, %v443, %v485
        %v530 = vsel %vm514, %v447, %v489
        %v531 = vsel %vm515, %v451, %v493
        %v532 = vsel %vm516, %v455, %v497
        %v533 = vsel %vm517, %v459, %v501
        %v534 = vsel %vm518, %v431, %v473
        %v535 = vsel %vm519, %v435, %v477
        %v536 = vsel %vm520, %v439, %v481
        %v537 = vsel %vm521, %v443, %v485
        %v538 = vsel %vm522, %v447, %v489
        %v539 = vsel %vm523, %v451, %v493
        %v540 = vsel %vm524, %v455, %v497
        %v541 = vsel %vm525, %v459, %v501
        %v542 = vmul.f32 %v394, %v526
        %v543 = vmul.f32 %v395, %v527
        %v544 = vmul.f32 %v396, %v528
        %v545 = vmul.f32 %v397, %v529
        %v546 = vmul.f32 %v398, %v530
        %v547 = vmul.f32 %v399, %v531
        %v548 = vmul.f32 %v400, %v532
        %v549 = vmul.f32 %v401, %v533
        %v550 = vmul.f32 %v402, %v534
        %v551 = vmul.f32 %v403, %v535
        %v552 = vmul.f32 %v404, %v536
        %v553 = vmul.f32 %v405, %v537
        %v554 = vmul.f32 %v406, %v538
        %v555 = vmul.f32 %v407, %v539
        %v556 = vmul.f32 %v408, %v540
        %v557 = vmul.f32 %v409, %v541
        %vm558 = vcmp.gt.f32.partialorder %v410, 0.0
        %vm559 = vcmp.gt.f32.partialorder %v411, 0.0
        %vm560 = vcmp.gt.f32.partialorder %v412, 0.0
        %vm561 = vcmp.gt.f32.partialorder %v413, 0.0
        %vm562 = vcmp.gt.f32.partialorder %v414, 0.0
        %vm563 = vcmp.gt.f32.partialorder %v415, 0.0
        %vm564 = vcmp.gt.f32.partialorder %v416, 0.0
        %vm565 = vcmp.gt.f32.partialorder %v417, 0.0
        %vm566 = vcmp.gt.f32.partialorder %v418, 0.0
        %vm567 = vcmp.gt.f32.partialorder %v419, 0.0
        %vm568 = vcmp.gt.f32.partialorder %v420, 0.0
        %vm569 = vcmp.gt.f32.partialorder %v421, 0.0
        %vm570 = vcmp.gt.f32.partialorder %v422, 0.0
        %vm571 = vcmp.gt.f32.partialorder %v423, 0.0
        %vm572 = vcmp.gt.f32.partialorder %v424, 0.0
        %vm573 = vcmp.gt.f32.partialorder %v425, 0.0
        %v574 = vsel %vm558, %v473, %v431
        %v575 = vsel %vm559, %v477, %v435
        %v576 = vsel %vm560, %v481, %v439
        %v577 = vsel %vm561, %v485, %v443
        %v578 = vsel %vm562, %v489, %v447
        %v579 = vsel %vm563, %v493, %v451
        %v580 = vsel %vm564, %v497, %v455
        %v581 = vsel %vm565, %v501, %v459
        %v582 = vsel %vm566, %v473, %v431
        %v583 = vsel %vm567, %v477, %v435
        %v584 = vsel %vm568, %v481, %v439
        %v585 = vsel %vm569, %v485, %v443
        %v586 = vsel %vm570, %v489, %v447
        %v587 = vsel %vm571, %v493, %v451
        %v588 = vsel %vm572, %v497, %v455
        %v589 = vsel %vm573, %v501, %v459
        %v590 = vmul.f32 %v410, %v574
        %v591 = vmul.f32 %v411, %v575
        %v592 = vmul.f32 %v412, %v576
        %v593 = vmul.f32 %v413, %v577
        %v594 = vmul.f32 %v414, %v578
        %v595 = vmul.f32 %v415, %v579
        %v596 = vmul.f32 %v416, %v580
        %v597 = vmul.f32 %v417, %v581
        %v598 = vmul.f32 %v418, %v582
        %v599 = vmul.f32 %v419, %v583
        %v600 = vmul.f32 %v420, %v584
        %v601 = vmul.f32 %v421, %v585
        %v602 = vmul.f32 %v422, %v586
        %v603 = vmul.f32 %v423, %v587
        %v604 = vmul.f32 %v424, %v588
        %v605 = vmul.f32 %v425, %v589
        %v606 = vadd.f32 %v542, %v543
        %v607 = vadd.f32 %v550, %v551
        %v608 = vadd.f32 %v590, %v591
        %v609 = vadd.f32 %v598, %v599
        %v610 = vadd.f32 %v606, %v544
        %v611 = vadd.f32 %v607, %v552
        %v612 = vadd.f32 %v608, %v592
        %v613 = vadd.f32 %v609, %v600
        %v614 = vadd.f32 %v610, %v545
        %v615 = vadd.f32 %v611, %v553
        %v616 = vadd.f32 %v612, %v593
        %v617 = vadd.f32 %v613, %v601
        %v618 = vadd.f32 %v614, %v546
        %v619 = vadd.f32 %v615, %v554
        %v620 = vadd.f32 %v616, %v594
        %v621 = vadd.f32 %v617, %v602
        %v622 = vadd.f32 %v618, %v547
        %v623 = vadd.f32 %v619, %v555
        %v624 = vadd.f32 %v620, %v595
        %v625 = vadd.f32 %v621, %v603
        %v626 = vadd.f32 %v622, %v548
        %v627 = vadd.f32 %v623, %v556
        %v628 = vadd.f32 %v624, %v596
        %v629 = vadd.f32 %v625, %v604
        %v630 = vadd.f32 %v626, %v549
        %v631 = vadd.f32 %v627, %v557
        %v632 = vadd.f32 %v628, %v597
        %v633 = vadd.f32 %v629, %v605
        %v634 = vld [vmem:[#allocation2] sm:$0xff]
        %v635 = vld [vmem:[#allocation2 + $0x8] sm:$0xff]
        %v636 = vadd.f32 %v634, %v630
        %v637 = vadd.f32 %v635, %v631
        %638 = vst [vmem:[#allocation2] sm:$0xff] %v636
        %639 = vst [vmem:[#allocation2 + $0x8] sm:$0xff] %v637
        %v640 = vld [vmem:[#allocation3] sm:$0xff]
        %v641 = vld [vmem:[#allocation3 + $0x8] sm:$0xff]
        %v642 = vadd.f32 %v640, %v632
        %v643 = vadd.f32 %v641, %v633
        %644 = vst [vmem:[#allocation3] sm:$0xff] %v642
        %645 = vst [vmem:[#allocation3 + $0x8] sm:$0xff] %v643
        // Predicated region
        $region53: #{backsubstitute_pallas.1} parent=35 // pred_check
          %p646 = pneg %p386
        $region54: #{backsubstitute_pallas.1} parent=35 // pred_check_branch
          %648 = sbr.rel (%p646) target = $region56
        $region55: #{backsubstitute_pallas.1} parent=35 // pred_region
          %v649 = vld [vmem:[#allocation2] sm:$0xff]
          %v650 = vld [vmem:[#allocation2 + $0x8] sm:$0xff]
          %651 = vadd.xlane.f32.xlu0 %v649
          %v652 = vpop.xlane.xlu0 %651
          %653 = vadd.xlane.f32.xlu0 %v650
          %v654 = vpop.xlane.xlu0 %653
          %vm655 = vcmask 7168
          %656 = vst.msk [vmem:[%s349] sm:$0xff] %vm655, %v652
          %657 = vst.msk [vmem:[%s349 + $0x8] sm:$0xff] %vm655, %v654
          %v658 = vld [vmem:[#allocation3] sm:$0xff]
          %v659 = vld [vmem:[#allocation3 + $0x8] sm:$0xff]
          %660 = vadd.xlane.f32.xlu0 %v658
          %v661 = vpop.xlane.xlu0 %660
          %662 = vadd.xlane.f32.xlu0 %v659
          %v663 = vpop.xlane.xlu0 %662
          %664 = vst.msk [vmem:[%s355] sm:$0xff] %vm655, %v661
          %665 = vst.msk [vmem:[%s355 + $0x8] sm:$0xff] %vm655, %v663
        $region56: #{backsubstitute_pallas.1} parent=35 // pred_fallthru
          _
        %s666 = sand.u32 %s151, 1
        %s667 = sand.u32 %s151, 1
        %s668 = smul.addr %s667, 16
        %s669 = scalar_lea.vmem [#allocation9], %s668
        %s670 = sand.u32 %s177, 1
        %s671 = sand.u32 %s177, 1
        %s672 = smul.addr %s671, 16
        %s673 = scalar_lea.vmem [#allocation10], %s672
        // Predicated region
        $region57: #{backsubstitute_pallas.1} parent=35 // pred_check
          %p674 = pneg %p161
        $region58: #{backsubstitute_pallas.1} parent=35 // pred_check_branch
          %676 = sbr.rel (%p674) target = $region60
        $region59: #{backsubstitute_pallas.1} parent=35 // pred_region
          %s677 = smul.u32 2, %s27
          %s678 = ssub.s32 3, %s677
          %p679 = scmp.lt.s32.totalorder %s678, 2
          %s680 = scalar_select %p679, %s678, 2
          %s681 = smul.u32 128, %s680
          %p682 = scmp.ne.s32.totalorder 0, %s681
          %s683 = smul.addr %s677, 8
          %s684 = scalar_lea.vmem %s4, %s683
          // Predicated region
          $region61: #{backsubstitute_pallas.1} parent=59 // pred_check
            %p685 = pneg %p682
          $region62: #{backsubstitute_pallas.1} parent=59 // pred_check_branch
            %687 = sbr.rel (%p685) target = $region64
          $region63: #{backsubstitute_pallas.1} parent=59 // pred_region
            // Predicated region
            $region65: #{backsubstitute_pallas.1} parent=63 // pred_check
              _
            $region66: #{backsubstitute_pallas.1} parent=63 // pred_check_branch
              %689 = sbr.rel (0) target = $region68
            $region67: #{backsubstitute_pallas.1} parent=63 // pred_region
              // Predicated region
              $region87: #{backsubstitute_pallas.1} parent=67 // pred_check
                _
              $region88: #{backsubstitute_pallas.1} parent=67 // pred_check_branch
                %741 = sbr.rel (0) target = $region90
              $region89: #{backsubstitute_pallas.1} parent=67 // pred_region
                %s742 = sshrl.u32 %s680, 1
                // While loop
                $region91: #{backsubstitute_pallas.1} parent=89 // loop_pre_header
                  _
                $region92: #{backsubstitute_pallas.1} parent=89 // loop_header
                  %s744 = sphi 0, %s746
                  %p745 = scmp.ge.s32.totalorder %s744, %s742
                  %s749 = sphi 0, %s758
                  %s750 = sphi %s669, %s761
                  %s751 = sphi %s684, %s762
                $region93: #{backsubstitute_pallas.1} parent=89 // loop_header_branch
                  %748 = sbr.rel (%p745) target = $region97
                $region94: #{backsubstitute_pallas.1} parent=89 // loop_body
                  %v752 = vld [vmem:[%s750] sm:$0xff]
                  %753 = vst [vmem:[%s751] sm:$0xff] %v752
                  %v754 = vld [vmem:[%s750 + $0x8] sm:$0xff]
                  %755 = vst [vmem:[%s751 + $0x8] sm:$0xff] %v754
                  %s756 = sadd.s32 1, %s749
                  %p757 = scmp.ge.s32.totalorder %s756, %s742
                  %s758 = scalar_select %p757, 0, %s756
                  %s759 = smul.u32 %s758, 16
                  %s760 = smul.u32 %s758, 16
                  %s761 = scalar_lea.vmem %s669, %s759 [#allocation9]
                  %s762 = scalar_lea.vmem %s684, %s760
                $region95: #{backsubstitute_pallas.1} parent=89 // loop_footer
                  %s746 = sadd.s32 %s744, 1
                $region96: #{backsubstitute_pallas.1} parent=89 // loop_footer_branch
                  %743 = sbr.rel target = $region92
                $region97: #{backsubstitute_pallas.1} parent=89 // loop_exit
                  _
                %s763 = sshrl.u32 %s680, 1
                %s764 = sand.u32 %s680, 1
                %s765 = smul.u32 %s763, 2
                %s766 = smul.u32 8, %s765
                %s767 = scalar_lea.vmem %s669, %s766 [#allocation9]
                %s768 = smul.u32 8, %s765
                %s769 = scalar_lea.vmem %s684, %s768
                // While loop
                $region98: #{backsubstitute_pallas.1} parent=89 // loop_pre_header
                  _
                $region99: #{backsubstitute_pallas.1} parent=89 // loop_header
                  %s771 = sphi 0, %s773
                  %p772 = scmp.ge.s32.totalorder %s771, %s764
                  %s776 = sphi 0, %s783
                  %s777 = sphi %s767, %s786
                  %s778 = sphi %s769, %s787
                $region100: #{backsubstitute_pallas.1} parent=89 // loop_header_branch
                  %775 = sbr.rel (%p772) target = $region104
                $region101: #{backsubstitute_pallas.1} parent=89 // loop_body
                  %v779 = vld [vmem:[%s777] sm:$0xff]
                  %780 = vst [vmem:[%s778] sm:$0xff] %v779
                  %s781 = sadd.s32 1, %s776
                  %p782 = scmp.ge.s32.totalorder %s781, %s764
                  %s783 = scalar_select %p782, 0, %s781
                  %s784 = smul.u32 %s783, 8
                  %s785 = smul.u32 %s783, 8
                  %s786 = scalar_lea.vmem %s767, %s784 [#allocation9]
                  %s787 = scalar_lea.vmem %s769, %s785
                $region102: #{backsubstitute_pallas.1} parent=89 // loop_footer
                  %s773 = sadd.s32 %s771, 1
                $region103: #{backsubstitute_pallas.1} parent=89 // loop_footer_branch
                  %770 = sbr.rel target = $region99
                $region104: #{backsubstitute_pallas.1} parent=89 // loop_exit
                  _
              $region90: #{backsubstitute_pallas.1} parent=67 // pred_fallthru
                _
              // Predicated region
              $region105: #{backsubstitute_pallas.1} parent=67 // pred_check
                _
              $region106: #{backsubstitute_pallas.1} parent=67 // pred_check_branch
                %789 = sbr.rel target = $region108
              $region107: #{backsubstitute_pallas.1} parent=67 // pred_region
                _
              $region108: #{backsubstitute_pallas.1} parent=67 // pred_fallthru
                _
            $region68: #{backsubstitute_pallas.1} parent=63 // pred_fallthru
              _
            // Predicated region
            $region69: #{backsubstitute_pallas.1} parent=63 // pred_check
              _
            $region70: #{backsubstitute_pallas.1} parent=63 // pred_check_branch
              %691 = sbr.rel target = $region72
            $region71: #{backsubstitute_pallas.1} parent=63 // pred_region
              %s693 = ssub.s32 256, 1
              %s694 = sshrl.u32 %s680, 1
              // While loop
              $region73: #{backsubstitute_pallas.1} parent=71 // loop_pre_header
                _
              $region74: #{backsubstitute_pallas.1} parent=71 // loop_header
                %s696 = sphi 0, %s698
                %p697 = scmp.ge.s32.totalorder %s696, %s694
                %s701 = sphi 0, %s710
                %s702 = sphi %s669, %s713
                %s703 = sphi %s684, %s714
              $region75: #{backsubstitute_pallas.1} parent=71 // loop_header_branch
                %700 = sbr.rel (%p697) target = $region79
              $region76: #{backsubstitute_pallas.1} parent=71 // loop_body
                %v704 = vld [vmem:[%s702] sm:%s693]
                %705 = vst [vmem:[%s703] sm:%s693] %v704
                %v706 = vld [vmem:[%s702 + $0x8] sm:%s693]
                %707 = vst [vmem:[%s703 + $0x8] sm:%s693] %v706
                %s708 = sadd.s32 1, %s701
                %p709 = scmp.ge.s32.totalorder %s708, %s694
                %s710 = scalar_select %p709, 0, %s708
                %s711 = smul.u32 %s710, 16
                %s712 = smul.u32 %s710, 16
                %s713 = scalar_lea.vmem %s669, %s711 [#allocation9]
                %s714 = scalar_lea.vmem %s684, %s712
              $region77: #{backsubstitute_pallas.1} parent=71 // loop_footer
                %s698 = sadd.s32 %s696, 1
              $region78: #{backsubstitute_pallas.1} parent=71 // loop_footer_branch
                %695 = sbr.rel target = $region74
              $region79: #{backsubstitute_pallas.1} parent=71 // loop_exit
                _
              %s715 = sshrl.u32 %s680, 1
              %s716 = sand.u32 %s680, 1
              %s717 = smul.u32 %s715, 2
              %s718 = smul.u32 8, %s717
              %s719 = scalar_lea.vmem %s669, %s718 [#allocation9]
              %s720 = smul.u32 8, %s717
              %s721 = scalar_lea.vmem %s684, %s720
              // While loop
              $region80: #{backsubstitute_pallas.1} parent=71 // loop_pre_header
                _
              $region81: #{backsubstitute_pallas.1} parent=71 // loop_header
                %s723 = sphi 0, %s725
                %p724 = scmp.ge.s32.totalorder %s723, %s716
                %s728 = sphi 0, %s735
                %s729 = sphi %s719, %s738
                %s730 = sphi %s721, %s739
              $region82: #{backsubstitute_pallas.1} parent=71 // loop_header_branch
                %727 = sbr.rel (%p724) target = $region86
              $region83: #{backsubstitute_pallas.1} parent=71 // loop_body
                %v731 = vld [vmem:[%s729] sm:%s693]
                %732 = vst [vmem:[%s730] sm:%s693] %v731
                %s733 = sadd.s32 1, %s728
                %p734 = scmp.ge.s32.totalorder %s733, %s716
                %s735 = scalar_select %p734, 0, %s733
                %s736 = smul.u32 %s735, 8
                %s737 = smul.u32 %s735, 8
                %s738 = scalar_lea.vmem %s719, %s736 [#allocation9]
                %s739 = scalar_lea.vmem %s721, %s737
              $region84: #{backsubstitute_pallas.1} parent=71 // loop_footer
                %s725 = sadd.s32 %s723, 1
              $region85: #{backsubstitute_pallas.1} parent=71 // loop_footer_branch
                %722 = sbr.rel target = $region81
              $region86: #{backsubstitute_pallas.1} parent=71 // loop_exit
                _
            $region72: #{backsubstitute_pallas.1} parent=63 // pred_fallthru
              _
          $region64: #{backsubstitute_pallas.1} parent=59 // pred_fallthru
            _
          %790 = vnop
        $region60: #{backsubstitute_pallas.1} parent=35 // pred_fallthru
          _
        // Predicated region
        $region109: #{backsubstitute_pallas.1} parent=35 // pred_check
          %p791 = pneg %p187
        $region110: #{backsubstitute_pallas.1} parent=35 // pred_check_branch
          %793 = sbr.rel (%p791) target = $region112
        $region111: #{backsubstitute_pallas.1} parent=35 // pred_region
          %s794 = smul.u32 2, %s27
          %s795 = ssub.s32 3, %s794
          %p796 = scmp.lt.s32.totalorder %s795, 2
          %s797 = scalar_select %p796, %s795, 2
          %s798 = smul.u32 128, %s797
          %p799 = scmp.ne.s32.totalorder 0, %s798
          %s800 = smul.addr %s794, 8
          %s801 = scalar_lea.vmem %s5, %s800
          // Predicated region
          $region113: #{backsubstitute_pallas.1} parent=111 // pred_check
            %p802 = pneg %p799
          $region114: #{backsubstitute_pallas.1} parent=111 // pred_check_branch
            %804 = sbr.rel (%p802) target = $region116
          $region115: #{backsubstitute_pallas.1} parent=111 // pred_region
            // Predicated region
            $region117: #{backsubstitute_pallas.1} parent=115 // pred_check
              _
            $region118: #{backsubstitute_pallas.1} parent=115 // pred_check_branch
              %806 = sbr.rel (0) target = $region120
            $region119: #{backsubstitute_pallas.1} parent=115 // pred_region
              // Predicated region
              $region139: #{backsubstitute_pallas.1} parent=119 // pred_check
                _
              $region140: #{backsubstitute_pallas.1} parent=119 // pred_check_branch
                %858 = sbr.rel (0) target = $region142
              $region141: #{backsubstitute_pallas.1} parent=119 // pred_region
                %s859 = sshrl.u32 %s797, 1
                // While loop
                $region143: #{backsubstitute_pallas.1} parent=141 // loop_pre_header
                  _
                $region144: #{backsubstitute_pallas.1} parent=141 // loop_header
                  %s861 = sphi 0, %s863
                  %p862 = scmp.ge.s32.totalorder %s861, %s859
                  %s866 = sphi 0, %s875
                  %s867 = sphi %s673, %s878
                  %s868 = sphi %s801, %s879
                $region145: #{backsubstitute_pallas.1} parent=141 // loop_header_branch
                  %865 = sbr.rel (%p862) target = $region149
                $region146: #{backsubstitute_pallas.1} parent=141 // loop_body
                  %v869 = vld [vmem:[%s867] sm:$0xff]
                  %870 = vst [vmem:[%s868] sm:$0xff] %v869
                  %v871 = vld [vmem:[%s867 + $0x8] sm:$0xff]
                  %872 = vst [vmem:[%s868 + $0x8] sm:$0xff] %v871
                  %s873 = sadd.s32 1, %s866
                  %p874 = scmp.ge.s32.totalorder %s873, %s859
                  %s875 = scalar_select %p874, 0, %s873
                  %s876 = smul.u32 %s875, 16
                  %s877 = smul.u32 %s875, 16
                  %s878 = scalar_lea.vmem %s673, %s876 [#allocation10]
                  %s879 = scalar_lea.vmem %s801, %s877
                $region147: #{backsubstitute_pallas.1} parent=141 // loop_footer
                  %s863 = sadd.s32 %s861, 1
                $region148: #{backsubstitute_pallas.1} parent=141 // loop_footer_branch
                  %860 = sbr.rel target = $region144
                $region149: #{backsubstitute_pallas.1} parent=141 // loop_exit
                  _
                %s880 = sshrl.u32 %s797, 1
                %s881 = sand.u32 %s797, 1
                %s882 = smul.u32 %s880, 2
                %s883 = smul.u32 8, %s882
                %s884 = scalar_lea.vmem %s673, %s883 [#allocation10]
                %s885 = smul.u32 8, %s882
                %s886 = scalar_lea.vmem %s801, %s885
                // While loop
                $region150: #{backsubstitute_pallas.1} parent=141 // loop_pre_header
                  _
                $region151: #{backsubstitute_pallas.1} parent=141 // loop_header
                  %s888 = sphi 0, %s890
                  %p889 = scmp.ge.s32.totalorder %s888, %s881
                  %s893 = sphi 0, %s900
                  %s894 = sphi %s884, %s903
                  %s895 = sphi %s886, %s904
                $region152: #{backsubstitute_pallas.1} parent=141 // loop_header_branch
                  %892 = sbr.rel (%p889) target = $region156
                $region153: #{backsubstitute_pallas.1} parent=141 // loop_body
                  %v896 = vld [vmem:[%s894] sm:$0xff]
                  %897 = vst [vmem:[%s895] sm:$0xff] %v896
                  %s898 = sadd.s32 1, %s893
                  %p899 = scmp.ge.s32.totalorder %s898, %s881
                  %s900 = scalar_select %p899, 0, %s898
                  %s901 = smul.u32 %s900, 8
                  %s902 = smul.u32 %s900, 8
                  %s903 = scalar_lea.vmem %s884, %s901 [#allocation10]
                  %s904 = scalar_lea.vmem %s886, %s902
                $region154: #{backsubstitute_pallas.1} parent=141 // loop_footer
                  %s890 = sadd.s32 %s888, 1
                $region155: #{backsubstitute_pallas.1} parent=141 // loop_footer_branch
                  %887 = sbr.rel target = $region151
                $region156: #{backsubstitute_pallas.1} parent=141 // loop_exit
                  _
              $region142: #{backsubstitute_pallas.1} parent=119 // pred_fallthru
                _
              // Predicated region
              $region157: #{backsubstitute_pallas.1} parent=119 // pred_check
                _
              $region158: #{backsubstitute_pallas.1} parent=119 // pred_check_branch
                %906 = sbr.rel target = $region160
              $region159: #{backsubstitute_pallas.1} parent=119 // pred_region
                _
              $region160: #{backsubstitute_pallas.1} parent=119 // pred_fallthru
                _
            $region120: #{backsubstitute_pallas.1} parent=115 // pred_fallthru
              _
            // Predicated region
            $region121: #{backsubstitute_pallas.1} parent=115 // pred_check
              _
            $region122: #{backsubstitute_pallas.1} parent=115 // pred_check_branch
              %808 = sbr.rel target = $region124
            $region123: #{backsubstitute_pallas.1} parent=115 // pred_region
              %s810 = ssub.s32 256, 1
              %s811 = sshrl.u32 %s797, 1
              // While loop
              $region125: #{backsubstitute_pallas.1} parent=123 // loop_pre_header
                _
              $region126: #{backsubstitute_pallas.1} parent=123 // loop_header
                %s813 = sphi 0, %s815
                %p814 = scmp.ge.s32.totalorder %s813, %s811
                %s818 = sphi 0, %s827
                %s819 = sphi %s673, %s830
                %s820 = sphi %s801, %s831
              $region127: #{backsubstitute_pallas.1} parent=123 // loop_header_branch
                %817 = sbr.rel (%p814) target = $region131
              $region128: #{backsubstitute_pallas.1} parent=123 // loop_body
                %v821 = vld [vmem:[%s819] sm:%s810]
                %822 = vst [vmem:[%s820] sm:%s810] %v821
                %v823 = vld [vmem:[%s819 + $0x8] sm:%s810]
                %824 = vst [vmem:[%s820 + $0x8] sm:%s810] %v823
                %s825 = sadd.s32 1, %s818
                %p826 = scmp.ge.s32.totalorder %s825, %s811
                %s827 = scalar_select %p826, 0, %s825
                %s828 = smul.u32 %s827, 16
                %s829 = smul.u32 %s827, 16
                %s830 = scalar_lea.vmem %s673, %s828 [#allocation10]
                %s831 = scalar_lea.vmem %s801, %s829
              $region129: #{backsubstitute_pallas.1} parent=123 // loop_footer
                %s815 = sadd.s32 %s813, 1
              $region130: #{backsubstitute_pallas.1} parent=123 // loop_footer_branch
                %812 = sbr.rel target = $region126
              $region131: #{backsubstitute_pallas.1} parent=123 // loop_exit
                _
              %s832 = sshrl.u32 %s797, 1
              %s833 = sand.u32 %s797, 1
              %s834 = smul.u32 %s832, 2
              %s835 = smul.u32 8, %s834
              %s836 = scalar_lea.vmem %s673, %s835 [#allocation10]
              %s837 = smul.u32 8, %s834
              %s838 = scalar_lea.vmem %s801, %s837
              // While loop
              $region132: #{backsubstitute_pallas.1} parent=123 // loop_pre_header
                _
              $region133: #{backsubstitute_pallas.1} parent=123 // loop_header
                %s840 = sphi 0, %s842
                %p841 = scmp.ge.s32.totalorder %s840, %s833
                %s845 = sphi 0, %s852
                %s846 = sphi %s836, %s855
                %s847 = sphi %s838, %s856
              $region134: #{backsubstitute_pallas.1} parent=123 // loop_header_branch
                %844 = sbr.rel (%p841) target = $region138
              $region135: #{backsubstitute_pallas.1} parent=123 // loop_body
                %v848 = vld [vmem:[%s846] sm:%s810]
                %849 = vst [vmem:[%s847] sm:%s810] %v848
                %s850 = sadd.s32 1, %s845
                %p851 = scmp.ge.s32.totalorder %s850, %s833
                %s852 = scalar_select %p851, 0, %s850
                %s853 = smul.u32 %s852, 8
                %s854 = smul.u32 %s852, 8
                %s855 = scalar_lea.vmem %s836, %s853 [#allocation10]
                %s856 = scalar_lea.vmem %s838, %s854
              $region136: #{backsubstitute_pallas.1} parent=123 // loop_footer
                %s842 = sadd.s32 %s840, 1
              $region137: #{backsubstitute_pallas.1} parent=123 // loop_footer_branch
                %839 = sbr.rel target = $region133
              $region138: #{backsubstitute_pallas.1} parent=123 // loop_exit
                _
            $region124: #{backsubstitute_pallas.1} parent=115 // pred_fallthru
              _
          $region116: #{backsubstitute_pallas.1} parent=111 // pred_fallthru
            _
          %907 = vnop
        $region112: #{backsubstitute_pallas.1} parent=35 // pred_fallthru
          _
      $region36: #{backsubstitute_pallas.1} parent=5 // pred_fallthru
        _
      %p908 = scmp.le.s32.totalorder 2, %s18
      // Predicated region
      $region161: #{backsubstitute_pallas.1} parent=5 // pred_check
        %p909 = pneg %p908
      $region162: #{backsubstitute_pallas.1} parent=5 // pred_check_branch
        %911 = sbr.rel (%p909) target = $region164
      $region163: #{backsubstitute_pallas.1} parent=5 // pred_region
        %s912 = ssub.s32 %s18, 2
        // Predicated region
        $region165: #{backsubstitute_pallas.1} parent=163 // pred_check
          %p913 = pneg %p167
        $region166: #{backsubstitute_pallas.1} parent=163 // pred_check_branch
          %915 = sbr.rel (%p913) target = $region168
        $region167: #{backsubstitute_pallas.1} parent=163 // pred_region
          %s916 = sand.u32 %s152, 1
          %s917 = sand.u32 %s152, 1
          %s918 = smul.addr %s917, 16
          %s919 = scalar_lea.vmem [#allocation9], %s918
        $region168: #{backsubstitute_pallas.1} parent=163 // pred_fallthru
          _
        // Predicated region
        $region169: #{backsubstitute_pallas.1} parent=163 // pred_check
          %p920 = pneg %p193
        $region170: #{backsubstitute_pallas.1} parent=163 // pred_check_branch
          %922 = sbr.rel (%p920) target = $region172
        $region171: #{backsubstitute_pallas.1} parent=163 // pred_region
          %s923 = sand.u32 %s178, 1
          %s924 = sand.u32 %s178, 1
          %s925 = smul.addr %s924, 16
          %s926 = scalar_lea.vmem [#allocation10], %s925
        $region172: #{backsubstitute_pallas.1} parent=163 // pred_fallthru
          _
      $region164: #{backsubstitute_pallas.1} parent=5 // pred_fallthru
        _
    $region6: #{backsubstitute_pallas.1} parent=1 // loop_footer
      %s22 = sadd.s32 1, %s18
    $region7: #{backsubstitute_pallas.1} parent=1 // loop_footer_branch
      %17 = sbr.rel target = $region3
    $region8: #{backsubstitute_pallas.1} parent=1 // loop_exit
      _
    %927 = vsyncpa [#allocation5], 1
    %s928 = scalar_lea.sflag [#allocation5], 1
    %929 = vsyncpa %s928, 1
    %930 = vsyncpa [#allocation7], 1
    %s931 = scalar_lea.sflag [#allocation7], 1
    %932 = vsyncpa %s931, 1

</llo_original>
